<compile_context>
chip_gen: v5e
topology: v5e:2x2
jax: 0.10.0
libtpu: 0.0.40
codegen_flags: <defaults>
</compile_context>

<pallas_src>
import jax
import jax.numpy as jnp
import numpy as np
from jax.experimental import pallas as pl
from jax.experimental.pallas import tpu as pltpu

DECAY = 0.2
THRESH = 0.3
BETA = 0.07


def _round_up(x, m):
    return ((x + m - 1) // m) * m


# ----------------------------- Pallas kernels -------------------------------
def _conv_bn_kernel(p_ref, w_ref, scb_ref, out_ref):
    # mixed_at_mem path: fused conv+BN only (bf16 matmul, f32 accumulate).
    out_ref[...] = (
        jnp.dot(w_ref[...], p_ref[...], preferred_element_type=jnp.float32)
        + scb_ref[:, 0:1])


def _lsnn_first_kernel(p_ref, w_ref, scb_ref, spike_ref, memo_ref, ao_ref):
    # is_first: mem = a = 0  ->  v_th = thresh, a_new = spike.
    mem_this = (
        jnp.dot(w_ref[...], p_ref[...], preferred_element_type=jnp.float32)
        + scb_ref[:, 0:1])
    spike = (mem_this > THRESH).astype(jnp.float32)
    spike_ref[...] = spike.astype(spike_ref.dtype)     # bf16, exact for 0/1
    memo_ref[...] = mem_this * DECAY * (1.0 - spike)
    ao_ref[...] = spike                                  # exp(-1/rho)*0 + spike


def _lsnn_step_kernel(p_ref, w_ref, scb_ref, mem_ref, a_ref,
                      spike_ref, memo_ref, ao_ref):
    mem_this = (
        jnp.dot(w_ref[...], p_ref[...], preferred_element_type=jnp.float32)
        + scb_ref[:, 0:1])
    a_prev = a_ref[...]
    v_th = THRESH - BETA * a_prev                        # adaptive threshold A
    mem = mem_ref[...] + mem_this
    spike = (mem > v_th).astype(jnp.float32)             # input.gt(v_th).float()
    spike_ref[...] = spike.astype(spike_ref.dtype)
    memo_ref[...] = mem * DECAY * (1.0 - spike)
    ao_ref[...] = scb_ref[:, 1:2] * a_prev + spike       # exp(-1/rho)*a + spike


# -------------------------------- wrapper ------------------------------------
def snn_2d_lsnn_forward(x_nchw, weights, param, mem=None, a=None,
                        *, stride=1, padding=1):
    """One SNN_2d_lsnn forward step (eval-mode conv+BN fusion).

    Returns:
      mixed_at_mem=True : mem_this (NCHW, f32), like the PyTorch early return.
      otherwise         : (spike, mem_new, a_new) in NCHW; spike is bf16
                          (exactly 0/1), mem/a are f32 state to feed back.
    """
    x_nchw = x_nchw.astype(jnp.float32)
    conv_w = weights["conv_w"]            # (Cout, Cin, KH, KW)
    conv_b = weights["conv_b"]            # (Cout,)
    N, Cin, H, W = x_nchw.shape
    Cout, _, KH, KW = conv_w.shape
    Ho = (H + 2 * padding - KH) // stride + 1
    Wo = (W + 2 * padding - KW) // stride + 1
    Mh = Ho * Wo
    Kdim = KH * KW * Cin

    # --- fuse conv + BN (eval / running stats), same as fuse_conv_bn_eval ---
    scale = weights["bn_gamma"] / jnp.sqrt(weights["bn_var"] + weights["bn_eps"])
    w_f = conv_w * scale[:, None, None, None]
    b_f = (conv_b - weights["bn_mean"]) * scale + weights["bn_beta"]
    # (Cout, Kdim) with Kdim ordered (cin, kh, kw) == plain reshape of OIHW.
    w_matT = w_f.reshape(Cout, Kdim).astype(jnp.bfloat16)

    # bias column + exp(-1/rho) column merged into one tiny broadcast operand
    rho = jnp.clip(weights["rho"].reshape(Cout), 0.64, 1.1)
    scb = jnp.stack([b_f, jnp.exp(-1.0 / rho)], axis=1).astype(jnp.float32)  # (Cout, 2)

    # --- channel-major im2col straight from NCHW: (N, Kdim, Ho*Wo), bf16 -----
    x = x_nchw.astype(jnp.bfloat16)
    xp = jnp.pad(x, ((0, 0), (0, 0), (padding, padding), (padding, padding)))
    cols = []
    for kh in range(KH):
        for kw in range(KW):
            cols.append(xp[:, :, kh:kh + stride * Ho:stride,
                           kw:kw + stride * Wo:stride])
    patches = jnp.stack(cols, axis=2).reshape(N, Kdim, Mh)

    # --- lane tile along M = Ho*Wo (multiple of 128, VMEM-budget capped) -----
    per_lane_bytes = Kdim * 2 + Cout * 18           # patches + state/out columns
    tml_cap = max(128, ((8 << 20) // per_lane_bytes) // 128 * 128)
    TMl = min(tml_cap, _round_up(Mh, 128))
    Mp = _round_up(Mh, TMl)
    if Mp > Mh:
        patches = jnp.pad(patches, ((0, 0), (0, 0), (0, Mp - Mh)))

    grid = (N, Mp // TMl)
    p_spec = pl.BlockSpec((None, Kdim, TMl), lambda b, m: (b, 0, m))
    w_spec = pl.BlockSpec((Cout, Kdim), lambda b, m: (0, 0))
    scb_spec = pl.BlockSpec((Cout, 2), lambda b, m: (0, 0))
    row_spec = pl.BlockSpec((None, Cout, TMl), lambda b, m: (b, 0, m))

    # explicit VMEM budget: double-buffered blocks + headroom, <=32 MiB, and
    # further clamped to half of the queried per-core VMEM (v7x: 64 MiB/TC).
    blk_bytes = (TMl * Kdim * 2 + Cout * Kdim * 2 + Cout * 8
                 + 4 * Cout * TMl * 4 + Cout * TMl * 2)
    vmem_limit = int(min(max(3 * blk_bytes + (4 << 20), 16 << 20), 32 << 20))
    try:
        vmem_limit = min(vmem_limit,
                         int(pltpu.get_tpu_info().vmem_capacity_bytes) // 2)
    except Exception:
        pass
    cparams = pltpu.CompilerParams(
        dimension_semantics=("parallel", "parallel"),
        vmem_limit_bytes=vmem_limit)

    def to_nchw(flat):
        # kernel-native (N, Cout, Mp) -> NCHW is a slice + reshape (no transpose)
        return flat[:, :, :Mh].reshape(N, Cout, Ho, Wo)

    # ---------------- mixed_at_mem: conv+BN only, single lane-dense output ---
    if param.get("mixed_at_mem", False):
        mem_this = pl.pallas_call(
            _conv_bn_kernel,
            out_shape=jax.ShapeDtypeStruct((N, Cout, Mp), jnp.float32),
            grid=grid,
            in_specs=[p_spec, w_spec, scb_spec],
            out_specs=row_spec,
            compiler_params=cparams,
        )(patches, w_matT, scb)
        return to_nchw(mem_this)

    out_shapes = (jax.ShapeDtypeStruct((N, Cout, Mp), jnp.bfloat16),   # spike
                  jax.ShapeDtypeStruct((N, Cout, Mp), jnp.float32),    # mem_new
                  jax.ShapeDtypeStruct((N, Cout, Mp), jnp.float32))    # a_new
    out_specs = [row_spec, row_spec, row_spec]

    is_first = param.get("is_first", False) or mem is None or a is None
    if is_first:
        # no mem/a HBM reads and no wrapper-side zero-fill on the first step
        spike, mem_new, a_new = pl.pallas_call(
            _lsnn_first_kernel,
            out_shape=out_shapes,
            grid=grid,
            in_specs=[p_spec, w_spec, scb_spec],
            out_specs=out_specs,
            compiler_params=cparams,
        )(patches, w_matT, scb)
    else:
        # state arrives in NCHW; kernel-native layout is a free reshape of it
        mem_flat = mem.astype(jnp.float32).reshape(N, Cout, Mh)
        a_flat = a.astype(jnp.float32).reshape(N, Cout, Mh)
        if Mp > Mh:
            mem_flat = jnp.pad(mem_flat, ((0, 0), (0, 0), (0, Mp - Mh)))
            a_flat = jnp.pad(a_flat, ((0, 0), (0, 0), (0, Mp - Mh)))
        spike, mem_new, a_new = pl.pallas_call(
            _lsnn_step_kernel,
            out_shape=out_shapes,
            grid=grid,
            in_specs=[p_spec, w_spec, scb_spec, row_spec, row_spec],
            out_specs=out_specs,
            compiler_params=cparams,
        )(patches, w_matT, scb, mem_flat, a_flat)

    return to_nchw(spike), to_nchw(mem_new), to_nchw(a_new)


# --------------------------- pure-JAX reference ------------------------------
def _reference_conv_bn(x, w):
    y = jax.lax.conv_general_dilated(
        x, w["conv_w"], (1, 1), [(1, 1), (1, 1)],
        dimension_numbers=("NCHW", "OIHW", "NCHW"))
    y = y + w["conv_b"][None, :, None, None]
    scale = w["bn_gamma"] / jnp.sqrt(w["bn_var"] + w["bn_eps"])
    return ((y - w["bn_mean"][None, :, None, None]) * scale[None, :, None, None]
            + w["bn_beta"][None, :, None, None])


def _reference_step(x, w, mem, a):
    y = _reference_conv_bn(x, w)
    rho = jnp.clip(w["rho"], 0.64, 1.1)
    v_th = THRESH - BETA * a
    mem = mem + y
    spike = (mem > v_th).astype(jnp.float32)
    mem_new = mem * DECAY * (1.0 - spike)
    a_new = jnp.exp(-1.0 / rho) * a + spike
    return spike, mem_new, a_new, mem, v_th


# ----------------------------------- main -------------------------------------
if __name__ == "__main__":
    key = jax.random.PRNGKey(0)
    N, Cin, H, W = 2, 4, 16, 16
    Cout, KH, KW = 32, 3, 3

    ks = jax.random.split(key, 8)
    fan_in = Cin * KH * KW
    weights = {
        "conv_w": jax.random.uniform(ks[0], (Cout, Cin, KH, KW), jnp.float32,
                                     -1.0 / np.sqrt(fan_in), 1.0 / np.sqrt(fan_in)),
        "conv_b": jax.random.uniform(ks[1], (Cout,), jnp.float32,
                                     -1.0 / np.sqrt(fan_in), 1.0 / np.sqrt(fan_in)),
        "bn_gamma": 1.0 + 0.1 * jax.random.normal(ks[2], (Cout,), jnp.float32),
        "bn_beta": 0.1 * jax.random.normal(ks[3], (Cout,), jnp.float32),
        "bn_mean": 0.1 * jax.random.normal(ks[4], (Cout,), jnp.float32),
        "bn_var": 1.0 + jnp.abs(0.1 * jax.random.normal(ks[5], (Cout,), jnp.float32)),
        "bn_eps": jnp.float32(1e-5),
        "rho": 0.87 * jnp.ones((Cout, 1, 1), jnp.float32),   # as in __init__
    }
    x1 = jax.random.normal(ks[6], (N, Cin, H, W), jnp.float32)
    x2 = jax.random.normal(ks[7], (N, Cin, H, W), jnp.float32)

    # step 1 (is_first -> zero state), step 2 (carry state), plus mixed path
    spike1, mem1, a1 = snn_2d_lsnn_forward(
        x1, weights, {"mixed_at_mem": False, "is_first": True})
    spike2, mem2, a2 = snn_2d_lsnn_forward(
        x2, weights, {"mixed_at_mem": False, "is_first": False}, mem1, a1)
    y_mixed = snn_2d_lsnn_forward(
        x1, weights, {"mixed_at_mem": True, "is_first": True})
    jax.block_until_ready((spike1, mem1, a1, spike2, mem2, a2, y_mixed))

    # --- reference checks (bf16 matmul => mask elements near the threshold) ---
    TOL = 3e-2
    y_ref = _reference_conv_bn(x1, weights)
    assert bool(jnp.max(jnp.abs(y_mixed - y_ref)) < TOL)

    # per-step transition check: feed the reference the same input state
    checks = [
        (x1, jnp.zeros_like(mem1), jnp.zeros_like(a1), spike1, mem1, a1),
        (x2, mem1, a1, spike2, mem2, a2),
    ]
    for x_t, m_in, a_in, s_k, m_k, a_k in checks:
        rs, rm, ran, rpre, rvth = _reference_step(x_t, weights, m_in, a_in)
        boundary = jnp.abs(rpre - rvth) < TOL
        s_k = s_k.astype(jnp.float32)          # spike is exact 0/1 in bf16
        assert bool(jnp.all((s_k == rs) | boundary))
        assert bool(jnp.all((jnp.abs(m_k - rm) < TOL) | boundary))
        assert bool(jnp.all((jnp.abs(a_k - ran) < TOL) | boundary))

    print("KERNEL_OK")
</pallas_src>

<mosaic_0001>
module attributes {stable_mosaic.version = 11 : i64} {
  func.func @_lsnn_first_kernel(%arg0: i32, %arg1: i32, %arg2: memref<1x36x256xbf16, #tpu.memory_space<vmem>>, %arg3: memref<32x36xbf16, #tpu.memory_space<vmem>>, %arg4: memref<32x2xf32, #tpu.memory_space<vmem>>, %arg5: memref<1x32x256xbf16, #tpu.memory_space<vmem>>, %arg6: memref<1x32x256xf32, #tpu.memory_space<vmem>>, %arg7: memref<1x32x256xf32, #tpu.memory_space<vmem>>) attributes {dimension_semantics = [#tpu.dimension_semantics<parallel>, #tpu.dimension_semantics<parallel>], iteration_bounds = array<i64: 2, 1>, scalar_prefetch = 0 : i64, scratch_operands = 0 : i64, tpu.core_type = #tpu.core_type<tc>, window_params = [{transform_indices = @transform_0, window_bounds = array<i64: 1, 36, 256>}, {pipeline_mode = #tpu.pipeline_mode<synchronous>, transform_indices = @transform_1, window_bounds = array<i64: 32, 36>}, {pipeline_mode = #tpu.pipeline_mode<synchronous>, transform_indices = @transform_2, window_bounds = array<i64: 32, 2>}, {transform_indices = @transform_3, window_bounds = array<i64: 1, 32, 256>}, {transform_indices = @transform_4, window_bounds = array<i64: 1, 32, 256>}, {transform_indices = @transform_5, window_bounds = array<i64: 1, 32, 256>}]} {
    %c0 = arith.constant 0 : index
    %c0_0 = arith.constant 0 : index
    %0 = vector.load %arg3[%c0, %c0_0] : memref<32x36xbf16, #tpu.memory_space<vmem>>, vector<32x36xbf16>
    %c0_1 = arith.constant 0 : index
    %c0_2 = arith.constant 0 : index
    %c0_3 = arith.constant 0 : index
    %1 = vector.load %arg2[%c0_1, %c0_2, %c0_3] : memref<1x36x256xbf16, #tpu.memory_space<vmem>>, vector<1x36x256xbf16>
    %2 = vector.shape_cast %1 : vector<1x36x256xbf16> to vector<36x256xbf16>
    %cst = arith.constant dense<0.000000e+00> : vector<32x256xf32>
    %3 = tpu.matmul %0, %2, %cst {dimension_numbers = #tpu.dot_dimension_numbers<[1], [0], [0], [1], [0, 0, 1, 1], [], []>} : vector<32x36xbf16>, vector<36x256xbf16>, vector<32x256xf32> -> vector<32x256xf32>
    %c0_4 = arith.constant 0 : index
    %c0_5 = arith.constant 0 : index
    %4 = vector.load %arg4[%c0_4, %c0_5] : memref<32x2xf32, #tpu.memory_space<vmem>>, vector<32x1xf32>
    %5 = vector.broadcast %4 : vector<32x1xf32> to vector<32x256xf32>
    %6 = arith.addf %3, %5 : vector<32x256xf32>
    %cst_6 = arith.constant 3.000000e-01 : f32
    %7 = vector.broadcast %cst_6 : f32 to vector<32x256xf32>
    %8 = arith.cmpf ogt, %6, %7 : vector<32x256xf32>
    %9 = arith.extui %8 : vector<32x256xi1> to vector<32x256xi32>
    %10 = arith.sitofp %9 : vector<32x256xi32> to vector<32x256xf32>
    %11 = arith.truncf %10 : vector<32x256xf32> to vector<32x256xbf16>
    %c0_7 = arith.constant 0 : index
    %c0_8 = arith.constant 0 : index
    %c0_9 = arith.constant 0 : index
    %12 = vector.load %arg5[%c0_7, %c0_8, %c0_9] : memref<1x32x256xbf16, #tpu.memory_space<vmem>>, vector<1x32x256xbf16>
    %13 = vector.shape_cast %12 : vector<1x32x256xbf16> to vector<32x256xbf16>
    %14 = vector.shape_cast %11 : vector<32x256xbf16> to vector<1x32x256xbf16>
    tpu.vector_store %arg5[%c0_7, %c0_8, %c0_9], %14 {strides = array<i32>} : memref<1x32x256xbf16, #tpu.memory_space<vmem>>, vector<1x32x256xbf16>,
    %cst_10 = arith.constant 2.000000e-01 : f32
    %15 = vector.broadcast %cst_10 : f32 to vector<32x256xf32>
    %16 = arith.mulf %6, %15 : vector<32x256xf32>
    %cst_11 = arith.constant 1.000000e+00 : f32
    %17 = vector.broadcast %cst_11 : f32 to vector<32x256xf32>
    %18 = arith.subf %17, %10 : vector<32x256xf32>
    %19 = arith.mulf %16, %18 : vector<32x256xf32>
    %c0_12 = arith.constant 0 : index
    %c0_13 = arith.constant 0 : index
    %c0_14 = arith.constant 0 : index
    %20 = vector.load %arg6[%c0_12, %c0_13, %c0_14] : memref<1x32x256xf32, #tpu.memory_space<vmem>>, vector<1x32x256xf32>
    %21 = vector.shape_cast %20 : vector<1x32x256xf32> to vector<32x256xf32>
    %22 = vector.shape_cast %19 : vector<32x256xf32> to vector<1x32x256xf32>
    tpu.vector_store %arg6[%c0_12, %c0_13, %c0_14], %22 {strides = array<i32>} : memref<1x32x256xf32, #tpu.memory_space<vmem>>, vector<1x32x256xf32>,
    %c0_15 = arith.constant 0 : index
    %c0_16 = arith.constant 0 : index
    %c0_17 = arith.constant 0 : index
    %23 = vector.load %arg7[%c0_15, %c0_16, %c0_17] : memref<1x32x256xf32, #tpu.memory_space<vmem>>, vector<1x32x256xf32>
    %24 = vector.shape_cast %23 : vector<1x32x256xf32> to vector<32x256xf32>
    %25 = vector.shape_cast %10 : vector<32x256xf32> to vector<1x32x256xf32>
    tpu.vector_store %arg7[%c0_15, %c0_16, %c0_17], %25 {strides = array<i32>} : memref<1x32x256xf32, #tpu.memory_space<vmem>>, vector<1x32x256xf32>,
    return
  }
  func.func @transform_0(%arg0: i32, %arg1: i32) -> (i32, i32, i32) {
    %c0_i32 = arith.constant 0 : i32
    %c0_i32_0 = arith.constant 0 : i32
    return %arg0, %c0_i32, %arg1 : i32, i32, i32
  }
  func.func @transform_1(%arg0: i32, %arg1: i32) -> (i32, i32) {
    %c0_i32 = arith.constant 0 : i32
    %c0_i32_0 = arith.constant 0 : i32
    %c0_i32_1 = arith.constant 0 : i32
    return %c0_i32, %c0_i32_0 : i32, i32
  }
  func.func @transform_2(%arg0: i32, %arg1: i32) -> (i32, i32) {
    %c0_i32 = arith.constant 0 : i32
    %c0_i32_0 = arith.constant 0 : i32
    %c0_i32_1 = arith.constant 0 : i32
    return %c0_i32, %c0_i32_0 : i32, i32
  }
  func.func @transform_3(%arg0: i32, %arg1: i32) -> (i32, i32, i32) {
    %c0_i32 = arith.constant 0 : i32
    %c0_i32_0 = arith.constant 0 : i32
    return %arg0, %c0_i32, %arg1 : i32, i32, i32
  }
  func.func @transform_4(%arg0: i32, %arg1: i32) -> (i32, i32, i32) {
    %c0_i32 = arith.constant 0 : i32
    %c0_i32_0 = arith.constant 0 : i32
    return %arg0, %c0_i32, %arg1 : i32, i32, i32
  }
  func.func @transform_5(%arg0: i32, %arg1: i32) -> (i32, i32, i32) {
    %c0_i32 = arith.constant 0 : i32
    %c0_i32_0 = arith.constant 0 : i32
    return %arg0, %c0_i32, %arg1 : i32, i32, i32
  }
}

</mosaic_0001>

<llo_original>
// kernel: tpu_custom_call.1
$region0: #{tpu_custom_call.1}
  #allocation0 [shape = 'u32[]', space=smem, size = 0x4, offset = 0x4, fixed_abs, tag = 'smem constant byte address 0x4 - core index']
  #allocation1 [shape = 'u32[72,128]{1,0:T(1,128)}', space=vmem, size = 0x9000, scoped, tag = 'internal scratch']
  %s0 = inlined_call_operand.vmem [shape: bf16[2,36,256], index: 0, kind: input, shape index: {}]
  %s1 = inlined_call_operand.vmem [shape: bf16[32,36], index: 1, kind: input, shape index: {}]
  %s2 = inlined_call_operand.vmem [shape: f32[32,2], index: 2, kind: input, shape index: {}]
  %s3 = inlined_call_operand.hbm [shape: bf16[2,32,256], index: 3, kind: output, shape index: {0}]
  %s4 = inlined_call_operand.hbm [shape: f32[2,32,256], index: 4, kind: output, shape index: {1}]
  %s5 = inlined_call_operand.hbm [shape: f32[2,32,256], index: 5, kind: output, shape index: {2}]
  %6 = xla_tuple %s3, %s4, %s5
  %s7 = sld [smem:[#allocation0]]
  $region61: #{tpu_custom_call.1} parent=0
    _
  %s9 = ssub.s32 1, %s7
  %s10 = scalar_select 0, %s9, %s7
  $region1: #{tpu_custom_call.1} parent=0
    #allocation2 [shape = 'u8[32768]{0}', space=vmem, size = 0x8000, scoped, tag = 'output window, operand 0']
    #allocation3 [shape = 's32[2]{0}', space=sflag, size = 0x8, scoped, tag = 'scoped memory for tpu_custom_call.1']
    #allocation4 [shape = 'u8[65536]{0}', space=vmem, size = 0x10000, scoped, tag = 'output window, operand 1']
    #allocation5 [shape = 's32[2]{0}', space=sflag, size = 0x8, scoped, tag = 'scoped memory for tpu_custom_call.1']
    #allocation6 [shape = 'u8[65536]{0}', space=vmem, size = 0x10000, scoped, tag = 'output window, operand 2']
    %11 = vsyncpa [#allocation3], 0
    %s12 = scalar_lea.sflag [#allocation3], 1
    %13 = vsyncpa %s12, 0
    %14 = vsyncpa [#allocation5], 0
    %s15 = scalar_lea.sflag [#allocation5], 1
    %16 = vsyncpa %s15, 0
    loop: start=0, step=1, limit=4
    $region2: #{tpu_custom_call.1} parent=1 // loop_pre_header
      _
    $region3: #{tpu_custom_call.1} parent=1 // loop_header
      %s18 = sphi 0, %s22
      %p19 = scmp.ge.s32.totalorder %s18, 4
      %s25 = sphi 0, %s37
      %s26 = sphi 0, %s33
      %s27 = sphi 0, %s25
      %s28 = sphi 0, %s26
      %s29 = sphi 0, %s27
      %s30 = sphi 0, %s28
      %s42 = sphi 0, %s44
      %s45 = sphi 0, %s42
      %s46 = sphi 0, %s45
      %s62 = sphi 0, %s46
      %s66 = sphi 0, %s66
      %s68 = sphi 0, %s66
      %s69 = sphi 0, %s68
      %s83 = sphi 0, %s69
      %s87 = sphi 0, %s87
      %s89 = sphi 0, %s87
      %s90 = sphi 0, %s89
      %s104 = sphi 0, %s90
      %s112 = sphi 0, %s114
      %s115 = sphi 0, %s112
      %s116 = sphi 0, %s115
      %s132 = sphi 0, %s116
      %s140 = sphi 0, %s142
      %s143 = sphi 0, %s140
      %s144 = sphi 0, %s143
      %s160 = sphi 0, %s144
      %s168 = sphi 0, %s170
      %s171 = sphi 0, %s168
      %s172 = sphi 0, %s171
      %s188 = sphi 0, %s172
    $region4: #{tpu_custom_call.1} parent=1 // loop_header_branch
      %21 = sbr.rel (%p19) target = $region8
    $region5: #{tpu_custom_call.1} parent=1 // loop_body
      %s23 = ssub.s32 %s18, 1
      %s24 = ssub.s32 %s18, 2
      %s31 = sadd.s32 1, %s26
      %p32 = scmp.ge.s32.totalorder %s31, 1
      %s33 = scalar_select %p32, 0, %s31
      %s34 = sadd.s32 1, %s25
      %s35 = scalar_select %p32, %s34, %s25
      %p36 = scmp.ge.s32.totalorder %s35, 2
      %s37 = scalar_select %p36, 0, %s35
      %s38 = ssub.s32 %s25, %s37
      %s39 = ssub.s32 %s26, %s33
      %s40 = sor.u32 %s38, %s39
      %p41 = scmp.eq.s32.totalorder %s40, 0
      %s43 = sadd.s32 %s42, 1
      %s44 = scalar_select %p41, %s42, %s43
      %p47 = pneg %p41
      %p48 = scmp.eq.s32.totalorder %s18, 1
      %p49 = por %p47, %p48
      %p50 = scmp.ne.s32.totalorder %s42, %s45
      %p51 = scmp.eq.s32.totalorder %s18, 0
      %p52 = por %p50, %p51
      %p53 = scmp.ne.s32.totalorder %s42, %s45
      %p54 = scmp.eq.s32.totalorder %s23, 1
      %p55 = por %p53, %p54
      %p56 = scmp.ne.s32.totalorder %s45, %s46
      %p57 = scmp.eq.s32.totalorder %s23, 0
      %p58 = por %p56, %p57
      %p59 = scmp.ne.s32.totalorder %s45, %s46
      %p60 = scmp.eq.s32.totalorder %s24, 1
      %p61 = por %p59, %p60
      %p63 = scmp.ne.s32.totalorder %s46, %s62
      %p64 = scmp.eq.s32.totalorder %s24, 0
      %p65 = por %p63, %p64
      %s67 = sadd.s32 %s66, 1
      %p70 = scmp.eq.s32.totalorder %s18, 1
      %p71 = scmp.ne.s32.totalorder %s66, %s68
      %p72 = scmp.eq.s32.totalorder %s18, 0
      %p73 = por %p71, %p72
      %p74 = scmp.ne.s32.totalorder %s66, %s68
      %p75 = scmp.eq.s32.totalorder %s23, 1
      %p76 = por %p74, %p75
      %p77 = scmp.ne.s32.totalorder %s68, %s69
      %p78 = scmp.eq.s32.totalorder %s23, 0
      %p79 = por %p77, %p78
      %p80 = scmp.ne.s32.totalorder %s68, %s69
      %p81 = scmp.eq.s32.totalorder %s24, 1
      %p82 = por %p80, %p81
      %p84 = scmp.ne.s32.totalorder %s69, %s83
      %p85 = scmp.eq.s32.totalorder %s24, 0
      %p86 = por %p84, %p85
      %s88 = sadd.s32 %s87, 1
      %p91 = scmp.eq.s32.totalorder %s18, 1
      %p92 = scmp.ne.s32.totalorder %s87, %s89
      %p93 = scmp.eq.s32.totalorder %s18, 0
      %p94 = por %p92, %p93
      %p95 = scmp.ne.s32.totalorder %s87, %s89
      %p96 = scmp.eq.s32.totalorder %s23, 1
      %p97 = por %p95, %p96
      %p98 = scmp.ne.s32.totalorder %s89, %s90
      %p99 = scmp.eq.s32.totalorder %s23, 0
      %p100 = por %p98, %p99
      %p101 = scmp.ne.s32.totalorder %s89, %s90
      %p102 = scmp.eq.s32.totalorder %s24, 1
      %p103 = por %p101, %p102
      %p105 = scmp.ne.s32.totalorder %s90, %s104
      %p106 = scmp.eq.s32.totalorder %s24, 0
      %p107 = por %p105, %p106
      %s108 = ssub.s32 %s25, %s37
      %s109 = ssub.s32 %s26, %s33
      %s110 = sor.u32 %s108, %s109
      %p111 = scmp.eq.s32.totalorder %s110, 0
      %s113 = sadd.s32 %s112, 1
      %s114 = scalar_select %p111, %s112, %s113
      %p117 = pneg %p111
      %p118 = scmp.eq.s32.totalorder %s18, 1
      %p119 = por %p117, %p118
      %p120 = scmp.ne.s32.totalorder %s112, %s115
      %p121 = scmp.eq.s32.totalorder %s18, 0
      %p122 = por %p120, %p121
      %p123 = scmp.ne.s32.totalorder %s112, %s115
      %p124 = scmp.eq.s32.totalorder %s23, 1
      %p125 = por %p123, %p124
      %p126 = scmp.ne.s32.totalorder %s115, %s116
      %p127 = scmp.eq.s32.totalorder %s23, 0
      %p128 = por %p126, %p127
      %p129 = scmp.ne.s32.totalorder %s115, %s116
      %p130 = scmp.eq.s32.totalorder %s24, 1
      %p131 = por %p129, %p130
      %p133 = scmp.ne.s32.totalorder %s116, %s132
      %p134 = scmp.eq.s32.totalorder %s24, 0
      %p135 = por %p133, %p134
      %s136 = ssub.s32 %s25, %s37
      %s137 = ssub.s32 %s26, %s33
      %s138 = sor.u32 %s136, %s137
      %p139 = scmp.eq.s32.totalorder %s138, 0
      %s141 = sadd.s32 %s140, 1
      %s142 = scalar_select %p139, %s140, %s141
      %p145 = pneg %p139
      %p146 = scmp.eq.s32.totalorder %s18, 1
      %p147 = por %p145, %p146
      %p148 = scmp.ne.s32.totalorder %s140, %s143
      %p149 = scmp.eq.s32.totalorder %s18, 0
      %p150 = por %p148, %p149
      %p151 = scmp.ne.s32.totalorder %s140, %s143
      %p152 = scmp.eq.s32.totalorder %s23, 1
      %p153 = por %p151, %p152
      %p154 = scmp.ne.s32.totalorder %s143, %s144
      %p155 = scmp.eq.s32.totalorder %s23, 0
      %p156 = por %p154, %p155
      %p157 = scmp.ne.s32.totalorder %s143, %s144
      %p158 = scmp.eq.s32.totalorder %s24, 1
      %p159 = por %p157, %p158
      %p161 = scmp.ne.s32.totalorder %s144, %s160
      %p162 = scmp.eq.s32.totalorder %s24, 0
      %p163 = por %p161, %p162
      %s164 = ssub.s32 %s25, %s37
      %s165 = ssub.s32 %s26, %s33
      %s166 = sor.u32 %s164, %s165
      %p167 = scmp.eq.s32.totalorder %s166, 0
      %s169 = sadd.s32 %s168, 1
      %s170 = scalar_select %p167, %s168, %s169
      %p173 = pneg %p167
      %p174 = scmp.eq.s32.totalorder %s18, 1
      %p175 = por %p173, %p174
      %p176 = scmp.ne.s32.totalorder %s168, %s171
      %p177 = scmp.eq.s32.totalorder %s18, 0
      %p178 = por %p176, %p177
      %p179 = scmp.ne.s32.totalorder %s168, %s171
      %p180 = scmp.eq.s32.totalorder %s23, 1
      %p181 = por %p179, %p180
      %p182 = scmp.ne.s32.totalorder %s171, %s172
      %p183 = scmp.eq.s32.totalorder %s23, 0
      %p184 = por %p182, %p183
      %p185 = scmp.ne.s32.totalorder %s171, %s172
      %p186 = scmp.eq.s32.totalorder %s24, 1
      %p187 = por %p185, %p186
      %p189 = scmp.ne.s32.totalorder %s172, %s188
      %p190 = scmp.eq.s32.totalorder %s24, 0
      %p191 = por %p189, %p190
      %p192 = scmp.le.s32.totalorder 1, %s18
      %p193 = scmp.lt.s32.totalorder %s18, 3
      %p194 = pnand %p192, %p193
      %p195 = pneg %p194
      // Predicated region
      $region9: #{tpu_custom_call.1} parent=5 // pred_check
        _
      $region10: #{tpu_custom_call.1} parent=5 // pred_check_branch
        %197 = sbr.rel (%p194) target = $region12
      $region11: #{tpu_custom_call.1} parent=5 // pred_region
        %s198 = ssub.s32 %s18, 1
        // Predicated region
        $region13: #{tpu_custom_call.1} parent=11 // pred_check
          %p199 = pneg %p79
        $region14: #{tpu_custom_call.1} parent=11 // pred_check_branch
          %201 = sbr.rel (%p199) target = $region16
        $region15: #{tpu_custom_call.1} parent=11 // pred_region
          _
        $region16: #{tpu_custom_call.1} parent=11 // pred_fallthru
          _
        // Predicated region
        $region17: #{tpu_custom_call.1} parent=11 // pred_check
          %p202 = pneg %p100
        $region18: #{tpu_custom_call.1} parent=11 // pred_check_branch
          %204 = sbr.rel (%p202) target = $region20
        $region19: #{tpu_custom_call.1} parent=11 // pred_region
          _
        $region20: #{tpu_custom_call.1} parent=11 // pred_fallthru
          _
      $region12: #{tpu_custom_call.1} parent=5 // pred_fallthru
        _
      %p205 = scmp.lt.s32.totalorder %s18, 2
      // Predicated region
      $region21: #{tpu_custom_call.1} parent=5 // pred_check
        %p206 = pneg %p205
      $region22: #{tpu_custom_call.1} parent=5 // pred_check_branch
        %208 = sbr.rel (%p206) target = $region24
      $region23: #{tpu_custom_call.1} parent=5 // pred_region
        // Predicated region
        $region25: #{tpu_custom_call.1} parent=23 // pred_check
          %p209 = pneg %p52
        $region26: #{tpu_custom_call.1} parent=23 // pred_check_branch
          %211 = sbr.rel (%p209) target = $region28
        $region27: #{tpu_custom_call.1} parent=23 // pred_region
          %s212 = smul.u32 2, %s26
          %p213 = scmp.lt.s32.totalorder %s25, 1
          %s214 = scalar_select %p213, %s25, 1
          %p215 = scmp.lt.s32.totalorder %s212, 1
          %s216 = scalar_select %p215, %s212, 1
          %s217 = smul.addr %s214, 10
          %s218 = sadd.s32 %s216, %s217
          %s219 = smul.addr %s218, 4
          %s220 = scalar_lea.vmem %s0, %s219
          %s221 = smul.u32 2, %s26
        $region28: #{tpu_custom_call.1} parent=23 // pred_fallthru
          _
      $region24: #{tpu_custom_call.1} parent=5 // pred_fallthru
        _
      %p222 = scmp.le.s32.totalorder 1, %s18
      %p223 = scmp.lt.s32.totalorder %s18, 3
      %p224 = pnand %p222, %p223
      %p225 = pneg %p224
      // Predicated region
      $region29: #{tpu_custom_call.1} parent=5 // pred_check
        _
      $region30: #{tpu_custom_call.1} parent=5 // pred_check_branch
        %227 = sbr.rel (%p224) target = $region32
      $region31: #{tpu_custom_call.1} parent=5 // pred_region
        %s228 = ssub.s32 %s18, 1
        %s229 = smul.u32 2, %s28
        %p230 = scmp.lt.s32.totalorder %s27, 1
        %s231 = scalar_select %p230, %s27, 1
        %p232 = scmp.lt.s32.totalorder %s229, 1
        %s233 = scalar_select %p232, %s229, 1
        %s234 = smul.addr %s231, 10
        %s235 = sadd.s32 %s233, %s234
        %s236 = smul.addr %s235, 4
        %s237 = scalar_lea.vmem %s0, %s236
        %p238 = pneg %p58
        %p239 = pneg %p55
        %p240 = pneg %p79
        %p241 = pneg %p76
        %p242 = pneg %p100
        %p243 = pneg %p97
        %p244 = pneg %p128
        %p245 = pneg %p125
        %s246 = sand.u32 %s115, 1
        %s247 = scalar_lea.sflag [#allocation3], %s246
        %s248 = sand.u32 %s115, 1
        %s249 = smul.addr %s248, 32
        %s250 = scalar_lea.vmem [#allocation2], %s249
        %p251 = pneg %p156
        %p252 = pneg %p153
        %s253 = sand.u32 %s23, 1
        %s254 = scalar_lea.sflag [#allocation5], %s253
        %s255 = sand.u32 %s143, 1
        %s256 = smul.addr %s255, 64
        %s257 = scalar_lea.vmem [#allocation4], %s256
        %p258 = pneg %p184
        %p259 = pneg %p181
        %s260 = sand.u32 %s23, 1
        %s261 = scalar_lea.sflag [#allocation5], %s260
        %s262 = sand.u32 %s171, 1
        %s263 = smul.addr %s262, 64
        %s264 = scalar_lea.vmem [#allocation6], %s263
        %s265 = smul.u32 2, %s28
        %p266 = scmp.lt.s32.totalorder %s27, 1
        %s267 = scalar_select %p266, %s27, 1
        %p268 = scmp.lt.s32.totalorder %s265, 1
        %s269 = scalar_select %p268, %s265, 1
        %s270 = smul.addr %s267, 10
        %s271 = sadd.s32 %s269, %s270
        %s272 = smul.addr %s271, 4
        %s273 = scalar_lea.vmem %s0, %s272
        %s274 = smul.u32 2, %s28
        %s275 = smul.u32 2, %s28
        %s276 = smul.u32 2, %s28
        %s277 = smul.u32 2, %s28
        %v279 = vld [vmem:[%s1] sm:$0xf]
        %v280 = vld [vmem:[%s1 + $0x4] sm:$0xf]
        %v281 = vld [vmem:[%s1 + $0x8] sm:$0xf]
        %v282 = vld [vmem:[%s1 + $0xc] sm:$0xf]
        %v283 = vld [vmem:[%s273] sm:$0xff]
        %v284 = vld [vmem:[%s273 + $0x8] sm:$0xff]
        %v285 = vld [vmem:[%s273 + $0x10] sm:$0xff]
        %v286 = vld [vmem:[%s273 + $0x18] sm:$0xff]
        %v287 = vld [vmem:[%s273 + $0x20] sm:$0x33]
        %v288 = vld [vmem:[%s2] sm:$0xff]
        %v289 = vld [vmem:[%s2 + $0x8] sm:$0xff]
        %v290 = vld [vmem:[%s2 + $0x10] sm:$0xff]
        %v291 = vld [vmem:[%s2 + $0x18] sm:$0xff]
        %293 = vset.pattern.permute.xlu0 0
        %294 = vperm.xlu0 %293, %v288
        %v295 = vpop.permute.xlu0 %294
        %298 = vset.pattern.permute.xlu0 0
        %299 = vperm.xlu0 %298, %v289
        %v300 = vpop.permute.xlu0 %299
        %303 = vset.pattern.permute.xlu0 0
        %304 = vperm.xlu0 %303, %v290
        %v305 = vpop.permute.xlu0 %304
        %308 = vset.pattern.permute.xlu0 0
        %309 = vperm.xlu0 %308, %v291
        %v310 = vpop.permute.xlu0 %309
        %v316 = vunpack.c.l.b16 %v279
        %v317 = vunpack.c.l.b16 %v280
        %v318 = vunpack.c.l.b16 %v281
        %v319 = vunpack.c.l.b16 %v282
        %v320 = vpack.c.b16 %v317, %v316
        %v321 = vpack.c.b16 %v319, %v318
        %v327 = vunpack.c.l.b16 %v283
        %v328 = vunpack.c.h.b16 %v283
        %v329 = vunpack.c.l.b16 %v284
        %v330 = vunpack.c.h.b16 %v284
        %v331 = vunpack.c.l.b16 %v285
        %v332 = vunpack.c.h.b16 %v285
        %v333 = vunpack.c.l.b16 %v286
        %v334 = vunpack.c.h.b16 %v286
        %v335 = vunpack.c.l.b16 %v287
        %v336 = vunpack.c.h.b16 %v287
        %v337 = vpack.c.b16 %v329, %v327
        %v338 = vpack.c.b16 %v330, %v328
        %v339 = vpack.c.b16 %v333, %v331
        %v340 = vpack.c.b16 %v334, %v332
        %v341 = vpack.c.b16 %v335, %v335
        %v342 = vpack.c.b16 %v336, %v336
        %vm347 = vcmask 293888
        %v349 = vsel %vm347, %v320, 0
        %v352 = vsel %vm347, %v321, 0
        %vm354 = vcmask 1041408
        %v356 = vsel %vm354, %v341, 0
        %v359 = vsel %vm354, %v342, 0
        %361 = vmatpush.bf16.msra.mxu0 0
        %362 = vmatpush.bf16.msra.mxu0 0
        %363 = vmatpush.bf16.msra.mxu0 0
        %364 = vmatpush.bf16.msra.mxu0 0
        %365 = vmatpush.bf16.msra.mxu0 0
        %366 = vmatpush.bf16.msra.mxu0 %v356
        %367 = vmatpush.bf16.msra.mxu0 %v339
        %368 = vmatpush.bf16.msra.mxu0 %v337
        %369 = vmatmul.bf16.gmra.mxu0 %v349
        %v370 = vpop.f32.mrf.mxu0
        %v371 = vadd.f32 %v295, %v370
        %v372 = vpop.f32.mrf.mxu0
        %v373 = vadd.f32 %v300, %v372
        %374 = vmatmul.bf16.gmra.mxu0 %v352
        %v375 = vpop.f32.mrf.mxu0
        %v376 = vadd.f32 %v305, %v375
        %v377 = vpop.f32.mrf.mxu0
        %v378 = vadd.f32 %v310, %v377
        %379 = vdwg.mxu0
        %380 = vmatpush.bf16.msra.mxu0 0
        %381 = vmatpush.bf16.msra.mxu0 0
        %382 = vmatpush.bf16.msra.mxu0 0
        %383 = vmatpush.bf16.msra.mxu0 0
        %384 = vmatpush.bf16.msra.mxu0 0
        %385 = vmatpush.bf16.msra.mxu0 %v359
        %386 = vmatpush.bf16.msra.mxu0 %v340
        %387 = vmatpush.bf16.msra.mxu0 %v338
        %388 = vmatmul.bf16.gmra.mxu0 %v349
        %v389 = vpop.f32.mrf.mxu0
        %v390 = vadd.f32 %v295, %v389
        %v391 = vpop.f32.mrf.mxu0
        %v392 = vadd.f32 %v300, %v391
        %393 = vmatmul.bf16.gmra.mxu0 %v352
        %v394 = vpop.f32.mrf.mxu0
        %v395 = vadd.f32 %v305, %v394
        %v396 = vpop.f32.mrf.mxu0
        %v397 = vadd.f32 %v310, %v396
        %398 = vdwg.mxu0
        %vm399 = vcmp.gt.f32.partialorder %v371, 0.3
        %vm400 = vcmp.gt.f32.partialorder %v390, 0.3
        %vm401 = vcmp.gt.f32.partialorder %v373, 0.3
        %vm402 = vcmp.gt.f32.partialorder %v392, 0.3
        %vm403 = vcmp.gt.f32.partialorder %v376, 0.3
        %vm404 = vcmp.gt.f32.partialorder %v395, 0.3
        %vm405 = vcmp.gt.f32.partialorder %v378, 0.3
        %vm406 = vcmp.gt.f32.partialorder %v397, 0.3
        %v407 = vsel %vm399, 1, 0
        %v408 = vsel %vm400, 1, 0
        %v409 = vsel %vm401, 1, 0
        %v410 = vsel %vm402, 1, 0
        %v411 = vsel %vm403, 1, 0
        %v412 = vsel %vm404, 1, 0
        %v413 = vsel %vm405, 1, 0
        %v414 = vsel %vm406, 1, 0
        %v415 = vcvt.s32.f32 %v407
        %v416 = vcvt.s32.f32 %v408
        %v417 = vcvt.s32.f32 %v409
        %v418 = vcvt.s32.f32 %v410
        %v419 = vcvt.s32.f32 %v411
        %v420 = vcvt.s32.f32 %v412
        %v421 = vcvt.s32.f32 %v413
        %v422 = vcvt.s32.f32 %v414
        %v423 = vpack.c.bf16 %v416, %v415
        %v424 = vpack.c.bf16 %v418, %v417
        %v425 = vpack.c.bf16 %v420, %v419
        %v426 = vpack.c.bf16 %v422, %v421
        %427 = vst [vmem:[%s250] sm:$0xff] %v423
        %428 = vst [vmem:[%s250 + $0x8] sm:$0xff] %v424
        %429 = vst [vmem:[%s250 + $0x10] sm:$0xff] %v425
        %430 = vst [vmem:[%s250 + $0x18] sm:$0xff] %v426
        %v431 = vmul.f32 %v371, 0.2
        %v432 = vmul.f32 %v390, 0.2
        %v433 = vmul.f32 %v373, 0.2
        %v434 = vmul.f32 %v392, 0.2
        %v435 = vmul.f32 %v376, 0.2
        %v436 = vmul.f32 %v395, 0.2
        %v437 = vmul.f32 %v378, 0.2
        %v438 = vmul.f32 %v397, 0.2
        %v439 = vsub.f32 1.0, %v415
        %v440 = vsub.f32 1.0, %v416
        %v441 = vsub.f32 1.0, %v417
        %v442 = vsub.f32 1.0, %v418
        %v443 = vsub.f32 1.0, %v419
        %v444 = vsub.f32 1.0, %v420
        %v445 = vsub.f32 1.0, %v421
        %v446 = vsub.f32 1.0, %v422
        %v447 = vmul.f32 %v431, %v439
        %v448 = vmul.f32 %v432, %v440
        %v449 = vmul.f32 %v433, %v441
        %v450 = vmul.f32 %v434, %v442
        %v451 = vmul.f32 %v435, %v443
        %v452 = vmul.f32 %v436, %v444
        %v453 = vmul.f32 %v437, %v445
        %v454 = vmul.f32 %v438, %v446
        %455 = vst [vmem:[%s257] sm:$0xff] %v447
        %456 = vst [vmem:[%s257 + $0x8] sm:$0xff] %v448
        %457 = vst [vmem:[%s257 + $0x10] sm:$0xff] %v449
        %458 = vst [vmem:[%s257 + $0x18] sm:$0xff] %v450
        %459 = vst [vmem:[%s257 + $0x20] sm:$0xff] %v451
        %460 = vst [vmem:[%s257 + $0x28] sm:$0xff] %v452
        %461 = vst [vmem:[%s257 + $0x30] sm:$0xff] %v453
        %462 = vst [vmem:[%s257 + $0x38] sm:$0xff] %v454
        %463 = vst [vmem:[%s264] sm:$0xff] %v415
        %464 = vst [vmem:[%s264 + $0x8] sm:$0xff] %v416
        %465 = vst [vmem:[%s264 + $0x10] sm:$0xff] %v417
        %466 = vst [vmem:[%s264 + $0x18] sm:$0xff] %v418
        %467 = vst [vmem:[%s264 + $0x20] sm:$0xff] %v419
        %468 = vst [vmem:[%s264 + $0x28] sm:$0xff] %v420
        %469 = vst [vmem:[%s264 + $0x30] sm:$0xff] %v421
        %470 = vst [vmem:[%s264 + $0x38] sm:$0xff] %v422
        %s471 = sand.u32 %s115, 1
        %s472 = scalar_lea.sflag [#allocation3], %s471
        %s473 = sand.u32 %s115, 1
        %s474 = smul.addr %s473, 32
        %s475 = scalar_lea.vmem [#allocation2], %s474
        %s476 = sand.u32 %s23, 1
        %s477 = scalar_lea.sflag [#allocation5], %s476
        %s478 = sand.u32 %s143, 1
        %s479 = smul.addr %s478, 64
        %s480 = scalar_lea.vmem [#allocation4], %s479
        %s481 = sand.u32 %s23, 1
        %s482 = scalar_lea.sflag [#allocation5], %s481
        %s483 = sand.u32 %s171, 1
        %s484 = smul.addr %s483, 64
        %s485 = scalar_lea.vmem [#allocation6], %s484
        // Predicated region
        $region33: #{tpu_custom_call.1} parent=31 // pred_check
          %p486 = pneg %p125
        $region34: #{tpu_custom_call.1} parent=31 // pred_check_branch
          %488 = sbr.rel (%p486) target = $region36
        $region35: #{tpu_custom_call.1} parent=31 // pred_region
          %s489 = smul.u32 2, %s28
          %491 = vsyncadd %s472, 0
          %s492 = smul.addr %s27, 8
          %s493 = sadd.s32 %s489, %s492
          %s494 = smul.addr %s493, 4
          %s495 = scalar_lea.hbm %s3, %s494
          %s496 = sshll.u32 %s475, 4
          %s497 = int_to_ptr.vmem [resolvable:$true] %s496
          %s498 = sshll.u32 %s495, 4
          %s499 = int_to_ptr.hbm [resolvable:$true] %s498
          %504 = dma.vmem_to_hbm [thread:$0]  %s497, 512, %s499, %s472, 128, 128, 8
        $region36: #{tpu_custom_call.1} parent=31 // pred_fallthru
          _
        // Predicated region
        $region37: #{tpu_custom_call.1} parent=31 // pred_check
          %p505 = pneg %p153
        $region38: #{tpu_custom_call.1} parent=31 // pred_check_branch
          %507 = sbr.rel (%p505) target = $region40
        $region39: #{tpu_custom_call.1} parent=31 // pred_region
          %s508 = smul.u32 2, %s28
          %510 = vsyncadd %s477, 0
          %s511 = smul.addr %s27, 8
          %s512 = sadd.s32 %s508, %s511
          %s513 = smul.addr %s512, 8
          %s514 = scalar_lea.hbm %s4, %s513
          %s515 = sshll.u32 %s480, 4
          %s516 = int_to_ptr.vmem [resolvable:$true] %s515
          %s517 = sshll.u32 %s514, 4
          %s518 = int_to_ptr.hbm [resolvable:$true] %s517
          %523 = dma.vmem_to_hbm [thread:$0]  %s516, 1024, %s518, %s477, 256, 256, 16
        $region40: #{tpu_custom_call.1} parent=31 // pred_fallthru
          _
        // Predicated region
        $region41: #{tpu_custom_call.1} parent=31 // pred_check
          %p524 = pneg %p181
        $region42: #{tpu_custom_call.1} parent=31 // pred_check_branch
          %526 = sbr.rel (%p524) target = $region44
        $region43: #{tpu_custom_call.1} parent=31 // pred_region
          %s527 = smul.u32 2, %s28
          %529 = vsyncadd %s482, 0
          %s530 = smul.addr %s27, 8
          %s531 = sadd.s32 %s527, %s530
          %s532 = smul.addr %s531, 8
          %s533 = scalar_lea.hbm %s5, %s532
          %s534 = sshll.u32 %s485, 4
          %s535 = int_to_ptr.vmem [resolvable:$true] %s534
          %s536 = sshll.u32 %s533, 4
          %s537 = int_to_ptr.hbm [resolvable:$true] %s536
          %542 = dma.vmem_to_hbm [thread:$0]  %s535, 1024, %s537, %s482, 256, 256, 16
        $region44: #{tpu_custom_call.1} parent=31 // pred_fallthru
          _
      $region32: #{tpu_custom_call.1} parent=5 // pred_fallthru
        _
      %p543 = scmp.le.s32.totalorder 2, %s18
      // Predicated region
      $region45: #{tpu_custom_call.1} parent=5 // pred_check
        %p544 = pneg %p543
      $region46: #{tpu_custom_call.1} parent=5 // pred_check_branch
        %546 = sbr.rel (%p544) target = $region48
      $region47: #{tpu_custom_call.1} parent=5 // pred_region
        %s547 = ssub.s32 %s18, 2
        // Predicated region
        $region49: #{tpu_custom_call.1} parent=47 // pred_check
          %p548 = pneg %p131
        $region50: #{tpu_custom_call.1} parent=47 // pred_check_branch
          %550 = sbr.rel (%p548) target = $region52
        $region51: #{tpu_custom_call.1} parent=47 // pred_region
          %s551 = sand.u32 %s116, 1
          %s552 = scalar_lea.sflag [#allocation3], %s551
          %s553 = sand.u32 %s116, 1
          %s554 = smul.addr %s553, 32
          %s555 = scalar_lea.vmem [#allocation2], %s554
          %557 = dma.done %s552, 512
        $region52: #{tpu_custom_call.1} parent=47 // pred_fallthru
          _
        // Predicated region
        $region53: #{tpu_custom_call.1} parent=47 // pred_check
          %p558 = pneg %p159
        $region54: #{tpu_custom_call.1} parent=47 // pred_check_branch
          %560 = sbr.rel (%p558) target = $region56
        $region55: #{tpu_custom_call.1} parent=47 // pred_region
          %s561 = sand.u32 %s24, 1
          %s562 = scalar_lea.sflag [#allocation5], %s561
          %s563 = sand.u32 %s144, 1
          %s564 = smul.addr %s563, 64
          %s565 = scalar_lea.vmem [#allocation4], %s564
          %567 = dma.done %s562, 1024
        $region56: #{tpu_custom_call.1} parent=47 // pred_fallthru
          _
        // Predicated region
        $region57: #{tpu_custom_call.1} parent=47 // pred_check
          %p568 = pneg %p187
        $region58: #{tpu_custom_call.1} parent=47 // pred_check_branch
          %570 = sbr.rel (%p568) target = $region60
        $region59: #{tpu_custom_call.1} parent=47 // pred_region
          %s571 = sand.u32 %s24, 1
          %s572 = scalar_lea.sflag [#allocation5], %s571
          %s573 = sand.u32 %s172, 1
          %s574 = smul.addr %s573, 64
          %s575 = scalar_lea.vmem [#allocation6], %s574
          %577 = dma.done %s572, 1024
        $region60: #{tpu_custom_call.1} parent=47 // pred_fallthru
          _
      $region48: #{tpu_custom_call.1} parent=5 // pred_fallthru
        _
    $region6: #{tpu_custom_call.1} parent=1 // loop_footer
      %s22 = sadd.s32 1, %s18
    $region7: #{tpu_custom_call.1} parent=1 // loop_footer_branch
      %17 = sbr.rel target = $region3
    $region8: #{tpu_custom_call.1} parent=1 // loop_exit
      _
    %578 = vsyncpa [#allocation3], 1
    %s579 = scalar_lea.sflag [#allocation3], 1
    %580 = vsyncpa %s579, 1
    %581 = vsyncpa [#allocation5], 1
    %s582 = scalar_lea.sflag [#allocation5], 1
    %583 = vsyncpa %s582, 1

</llo_original>
